<compile_context>
chip_gen: v7x
topology: tpu7x:2x2x1
jax: 0.10.0
libtpu: 0.0.40
codegen_flags: <defaults>
</compile_context>

<pallas_src>
import jax
import jax.numpy as jnp
from jax.experimental import pallas as pl
from jax.experimental.pallas import tpu as pltpu

IN_DIM = 8
HIDDEN_DIM = 128
OUT_DIM = 8


def _round_up(x, m):
    return ((x + m - 1) // m) * m


def qnetwork_kernel(x_ref, w1_ref, b1_ref, w2_ref, b2_ref, o_ref):
    # x:  (IN_DIM, TM)        feature-major batch tile
    # w1: (HIDDEN_DIM, IN_DIM)   PyTorch-native (out, in)
    # b1: (HIDDEN_DIM, 1)
    # w2: (OUT_DIM, HIDDEN_DIM)
    # b2: (OUT_DIM, 1)
    # o:  (OUT_DIM, TM)       lane-dense output tile (batch in lanes)
    x = x_ref[...]
    h = jnp.dot(w1_ref[...], x, preferred_element_type=jnp.float32) + b1_ref[...]
    h = jnp.maximum(h, 0.0)  # ReLU
    y = jnp.dot(w2_ref[...], h, preferred_element_type=jnp.float32) + b2_ref[...]
    o_ref[...] = y.astype(o_ref.dtype)


def qnetwork_forward(x, w1, b1, w2, b2, *, tm=1024):
    """Forward pass of QNetwork.

    x:  (B, 8)            float32 states (PyTorch layout)
    w1: (128, 8), b1: (128,)   -- fc1 weight/bias, PyTorch-native
    w2: (8, 128), b2: (8,)     -- fc2 weight/bias, PyTorch-native
    returns (B, 8)
    """
    B = x.shape[0]

    # Feature-major layout: batch lives in the lane (last) dimension.
    x_fm = x.T  # (IN_DIM, B)

    # Pad batch so the lane dim is a multiple of 128 and divisible by the tile.
    padded_b = max(_round_up(B, 128), 128)
    tile_m = min(tm, padded_b)          # tm and padded_b are multiples of 128
    padded_b = _round_up(padded_b, tile_m)
    if padded_b != B:
        x_fm = jnp.pad(x_fm, ((0, 0), (0, padded_b - B)))

    b1_2d = b1.reshape(HIDDEN_DIM, 1)
    b2_2d = b2.reshape(OUT_DIM, 1)

    grid = (padded_b // tile_m,)

    out_fm = pl.pallas_call(
        qnetwork_kernel,
        out_shape=jax.ShapeDtypeStruct((OUT_DIM, padded_b), x.dtype),
        grid_spec=pltpu.PrefetchScalarGridSpec(
            num_scalar_prefetch=0,
            grid=grid,
            in_specs=[
                # activations: tiled along the batch (lane) axis
                pl.BlockSpec((IN_DIM, tile_m), lambda i: (0, i)),
                # parameters: constant index_map -> stay resident in VMEM
                pl.BlockSpec((HIDDEN_DIM, IN_DIM), lambda i: (0, 0)),
                pl.BlockSpec((HIDDEN_DIM, 1), lambda i: (0, 0)),
                pl.BlockSpec((OUT_DIM, HIDDEN_DIM), lambda i: (0, 0)),
                pl.BlockSpec((OUT_DIM, 1), lambda i: (0, 0)),
            ],
            out_specs=pl.BlockSpec((OUT_DIM, tile_m), lambda i: (0, i)),
        ),
        compiler_params=pltpu.CompilerParams(
            # batch tiles are independent -> shard across TensorCores (v7x megacore)
            dimension_semantics=("parallel",),
        ),
    )(x_fm, w1, b1_2d, w2, b2_2d)

    # Back to PyTorch layout: (B, 8)
    return out_fm[:, :B].T


def init_params(key):
    # Mimic PyTorch's default nn.Linear init:
    # uniform(-1/sqrt(fan_in), 1/sqrt(fan_in)) for both weight and bias.
    k1, k2, k3, k4 = jax.random.split(key, 4)
    bound1 = 1.0 / jnp.sqrt(IN_DIM)
    bound2 = 1.0 / jnp.sqrt(HIDDEN_DIM)
    # PyTorch-native (out_features, in_features) orientation.
    w1 = jax.random.uniform(k1, (HIDDEN_DIM, IN_DIM), jnp.float32, -bound1, bound1)
    b1 = jax.random.uniform(k2, (HIDDEN_DIM,), jnp.float32, -bound1, bound1)
    w2 = jax.random.uniform(k3, (OUT_DIM, HIDDEN_DIM), jnp.float32, -bound2, bound2)
    b2 = jax.random.uniform(k4, (OUT_DIM,), jnp.float32, -bound2, bound2)
    return w1, b1, w2, b2


if __name__ == "__main__":
    key = jax.random.PRNGKey(0)
    k_params, k_x = jax.random.split(key)
    w1, b1, w2, b2 = init_params(k_params)

    batch = 8  # small example batch of "states"
    x = jax.random.normal(k_x, (batch, IN_DIM), jnp.float32)

    out = qnetwork_forward(x, w1, b1, w2, b2)
    out = jax.block_until_ready(out)

    # Plain-JAX reference (same math as the PyTorch module).
    ref = jnp.maximum(x @ w1.T + b1, 0.0) @ w2.T + b2
    assert out.shape == (batch, OUT_DIM)
    assert jnp.allclose(out, ref, atol=1e-5, rtol=1e-5)

    print("KERNEL_OK")
</pallas_src>

<mosaic_0001>
module attributes {stable_mosaic.version = 11 : i64} {
  func.func @qnetwork_kernel(%arg0: i32, %arg1: memref<8x128xf32, #tpu.memory_space<vmem>>, %arg2: memref<128x8xf32, #tpu.memory_space<vmem>>, %arg3: memref<128x1xf32, #tpu.memory_space<vmem>>, %arg4: memref<8x128xf32, #tpu.memory_space<vmem>>, %arg5: memref<8x1xf32, #tpu.memory_space<vmem>>, %arg6: memref<8x128xf32, #tpu.memory_space<vmem>>) attributes {dimension_semantics = [#tpu.dimension_semantics<parallel>], iteration_bounds = array<i64: 1>, scalar_prefetch = 0 : i64, scratch_operands = 0 : i64, tpu.core_type = #tpu.core_type<tc>, window_params = [{transform_indices = @transform_0, window_bounds = array<i64: 8, 128>}, {pipeline_mode = #tpu.pipeline_mode<synchronous>, transform_indices = @transform_1, window_bounds = array<i64: 128, 8>}, {pipeline_mode = #tpu.pipeline_mode<synchronous>, transform_indices = @transform_2, window_bounds = array<i64: 128, 1>}, {pipeline_mode = #tpu.pipeline_mode<synchronous>, transform_indices = @transform_3, window_bounds = array<i64: 8, 128>}, {pipeline_mode = #tpu.pipeline_mode<synchronous>, transform_indices = @transform_4, window_bounds = array<i64: 8, 1>}, {transform_indices = @transform_5, window_bounds = array<i64: 8, 128>}]} {
    %c0 = arith.constant 0 : index
    %c0_0 = arith.constant 0 : index
    %0 = vector.load %arg1[%c0, %c0_0] : memref<8x128xf32, #tpu.memory_space<vmem>>, vector<8x128xf32>
    %c0_1 = arith.constant 0 : index
    %c0_2 = arith.constant 0 : index
    %1 = vector.load %arg2[%c0_1, %c0_2] : memref<128x8xf32, #tpu.memory_space<vmem>>, vector<128x8xf32>
    %cst = arith.constant dense<0.000000e+00> : vector<128x128xf32>
    %2 = tpu.matmul %1, %0, %cst {dimension_numbers = #tpu.dot_dimension_numbers<[1], [0], [0], [1], [0, 0, 1, 1], [], []>} : vector<128x8xf32>, vector<8x128xf32>, vector<128x128xf32> -> vector<128x128xf32>
    %c0_3 = arith.constant 0 : index
    %c0_4 = arith.constant 0 : index
    %3 = vector.load %arg3[%c0_3, %c0_4] : memref<128x1xf32, #tpu.memory_space<vmem>>, vector<128x1xf32>
    %4 = vector.broadcast %3 : vector<128x1xf32> to vector<128x128xf32>
    %5 = arith.addf %2, %4 : vector<128x128xf32>
    %cst_5 = arith.constant 0.000000e+00 : f32
    %6 = vector.broadcast %cst_5 : f32 to vector<128x128xf32>
    %7 = arith.maximumf %5, %6 : vector<128x128xf32>
    %c0_6 = arith.constant 0 : index
    %c0_7 = arith.constant 0 : index
    %8 = vector.load %arg4[%c0_6, %c0_7] : memref<8x128xf32, #tpu.memory_space<vmem>>, vector<8x128xf32>
    %cst_8 = arith.constant dense<0.000000e+00> : vector<8x128xf32>
    %9 = tpu.matmul %8, %7, %cst_8 {dimension_numbers = #tpu.dot_dimension_numbers<[1], [0], [0], [1], [0, 0, 1, 1], [], []>} : vector<8x128xf32>, vector<128x128xf32>, vector<8x128xf32> -> vector<8x128xf32>
    %c0_9 = arith.constant 0 : index
    %c0_10 = arith.constant 0 : index
    %10 = vector.load %arg5[%c0_9, %c0_10] : memref<8x1xf32, #tpu.memory_space<vmem>>, vector<8x1xf32>
    %11 = vector.broadcast %10 : vector<8x1xf32> to vector<8x128xf32>
    %12 = arith.addf %9, %11 : vector<8x128xf32>
    %c0_11 = arith.constant 0 : index
    %c0_12 = arith.constant 0 : index
    %13 = vector.load %arg6[%c0_11, %c0_12] : memref<8x128xf32, #tpu.memory_space<vmem>>, vector<8x128xf32>
    tpu.vector_store %arg6[%c0_11, %c0_12], %12 {strides = array<i32>} : memref<8x128xf32, #tpu.memory_space<vmem>>, vector<8x128xf32>,
    return
  }
  func.func @transform_0(%arg0: i32) -> (i32, i32) {
    %c0_i32 = arith.constant 0 : i32
    %c0_i32_0 = arith.constant 0 : i32
    return %c0_i32, %arg0 : i32, i32
  }
  func.func @transform_1(%arg0: i32) -> (i32, i32) {
    %c0_i32 = arith.constant 0 : i32
    %c0_i32_0 = arith.constant 0 : i32
    %c0_i32_1 = arith.constant 0 : i32
    return %c0_i32, %c0_i32_0 : i32, i32
  }
  func.func @transform_2(%arg0: i32) -> (i32, i32) {
    %c0_i32 = arith.constant 0 : i32
    %c0_i32_0 = arith.constant 0 : i32
    %c0_i32_1 = arith.constant 0 : i32
    return %c0_i32, %c0_i32_0 : i32, i32
  }
  func.func @transform_3(%arg0: i32) -> (i32, i32) {
    %c0_i32 = arith.constant 0 : i32
    %c0_i32_0 = arith.constant 0 : i32
    %c0_i32_1 = arith.constant 0 : i32
    return %c0_i32, %c0_i32_0 : i32, i32
  }
  func.func @transform_4(%arg0: i32) -> (i32, i32) {
    %c0_i32 = arith.constant 0 : i32
    %c0_i32_0 = arith.constant 0 : i32
    %c0_i32_1 = arith.constant 0 : i32
    return %c0_i32, %c0_i32_0 : i32, i32
  }
  func.func @transform_5(%arg0: i32) -> (i32, i32) {
    %c0_i32 = arith.constant 0 : i32
    %c0_i32_0 = arith.constant 0 : i32
    return %c0_i32, %arg0 : i32, i32
  }
}

</mosaic_0001>

<llo_original>
// kernel: tpu_custom_call.1
$region0: #{tpu_custom_call.1}
  #allocation0 [shape = 'u32[]', space=smem, size = 0x4, offset = 0x4, fixed_abs, tag = 'smem constant byte address 0x4 - core index']
  #allocation1 [shape = 'u32[144,128]{1,0:T(1,128)}', space=vmem, size = 0x12000, scoped, tag = 'internal scratch']
  %s0 = inlined_call_operand.vmem [shape: f32[8,128], index: 0, kind: input, shape index: {}]
  %s1 = inlined_call_operand.vmem [shape: f32[128,8], index: 1, kind: input, shape index: {}]
  %s2 = inlined_call_operand.vmem [shape: f32[128,1], index: 2, kind: input, shape index: {}]
  %s3 = inlined_call_operand.vmem [shape: f32[8,128], index: 3, kind: input, shape index: {}]
  %s4 = inlined_call_operand.vmem [shape: f32[8,1], index: 4, kind: input, shape index: {}]
  %s5 = inlined_call_operand.hbm [shape: f32[8,128], index: 5, kind: output, shape index: {}]
  %s6 = sld [smem:[#allocation0]]
  $region30: #{tpu_custom_call.1} parent=0
    _
  %s8 = ssub.s32 1, %s6
  %s9 = scalar_select 0, %s8, %s6
  $region1: #{tpu_custom_call.1} parent=0
    #allocation2 [shape = 'u8[4096]{0}', space=vmem, size = 0x1000, scoped, tag = 'output window, operand 0, single buffered']
    #allocation3 [shape = 's32[1]{0}', space=sflag, size = 0x4, scoped, tag = 'scoped memory for tpu_custom_call.1']
    %10 = vsyncpa [#allocation3], 0
    // Predicated region
    $region2: #{tpu_custom_call.1} parent=1 // pred_check
      _
    $region3: #{tpu_custom_call.1} parent=1 // pred_check_branch
      %12 = sbr.rel (0) target = $region5
    $region4: #{tpu_custom_call.1} parent=1 // pred_region
      _
    $region5: #{tpu_custom_call.1} parent=1 // pred_fallthru
      _
    // Predicated region
    $region6: #{tpu_custom_call.1} parent=1 // pred_check
      _
    $region7: #{tpu_custom_call.1} parent=1 // pred_check_branch
      %14 = sbr.rel (0) target = $region9
    $region8: #{tpu_custom_call.1} parent=1 // pred_region
      _
    $region9: #{tpu_custom_call.1} parent=1 // pred_fallthru
      _
    // Predicated region
    $region10: #{tpu_custom_call.1} parent=1 // pred_check
      _
    $region11: #{tpu_custom_call.1} parent=1 // pred_check_branch
      %16 = sbr.rel (0) target = $region13
    $region12: #{tpu_custom_call.1} parent=1 // pred_region
      _
    $region13: #{tpu_custom_call.1} parent=1 // pred_fallthru
      _
    // Predicated region
    $region14: #{tpu_custom_call.1} parent=1 // pred_check
      _
    $region15: #{tpu_custom_call.1} parent=1 // pred_check_branch
      %18 = sbr.rel (0) target = $region17
    $region16: #{tpu_custom_call.1} parent=1 // pred_region
      _
    $region17: #{tpu_custom_call.1} parent=1 // pred_fallthru
      _
    // Predicated region
    $region18: #{tpu_custom_call.1} parent=1 // pred_check
      _
    $region19: #{tpu_custom_call.1} parent=1 // pred_check_branch
      %20 = sbr.rel (0) target = $region21
    $region20: #{tpu_custom_call.1} parent=1 // pred_region
      _
    $region21: #{tpu_custom_call.1} parent=1 // pred_fallthru
      _
    %v21 = vld [vmem:[%s0] sm:$0xff]
    %v22 = vld [vmem:[%s1] sm:$0xff]
    %v23 = vld [vmem:[%s1 + $0x8] sm:$0xff]
    %v24 = vld [vmem:[%s1 + $0x10] sm:$0xff]
    %v25 = vld [vmem:[%s1 + $0x18] sm:$0xff]
    %v26 = vld [vmem:[%s1 + $0x20] sm:$0xff]
    %v27 = vld [vmem:[%s1 + $0x28] sm:$0xff]
    %v28 = vld [vmem:[%s1 + $0x30] sm:$0xff]
    %v29 = vld [vmem:[%s1 + $0x38] sm:$0xff]
    %v30 = vld [vmem:[%s1 + $0x40] sm:$0xff]
    %v31 = vld [vmem:[%s1 + $0x48] sm:$0xff]
    %v32 = vld [vmem:[%s1 + $0x50] sm:$0xff]
    %v33 = vld [vmem:[%s1 + $0x58] sm:$0xff]
    %v34 = vld [vmem:[%s1 + $0x60] sm:$0xff]
    %v35 = vld [vmem:[%s1 + $0x68] sm:$0xff]
    %v36 = vld [vmem:[%s1 + $0x70] sm:$0xff]
    %v37 = vld [vmem:[%s1 + $0x78] sm:$0xff]
    %v38 = vld [vmem:[%s2] sm:$0xff]
    %v39 = vld [vmem:[%s2 + $0x8] sm:$0xff]
    %v40 = vld [vmem:[%s2 + $0x10] sm:$0xff]
    %v41 = vld [vmem:[%s2 + $0x18] sm:$0xff]
    %v42 = vld [vmem:[%s2 + $0x20] sm:$0xff]
    %v43 = vld [vmem:[%s2 + $0x28] sm:$0xff]
    %v44 = vld [vmem:[%s2 + $0x30] sm:$0xff]
    %v45 = vld [vmem:[%s2 + $0x38] sm:$0xff]
    %v46 = vld [vmem:[%s2 + $0x40] sm:$0xff]
    %v47 = vld [vmem:[%s2 + $0x48] sm:$0xff]
    %v48 = vld [vmem:[%s2 + $0x50] sm:$0xff]
    %v49 = vld [vmem:[%s2 + $0x58] sm:$0xff]
    %v50 = vld [vmem:[%s2 + $0x60] sm:$0xff]
    %v51 = vld [vmem:[%s2 + $0x68] sm:$0xff]
    %v52 = vld [vmem:[%s2 + $0x70] sm:$0xff]
    %v53 = vld [vmem:[%s2 + $0x78] sm:$0xff]
    %55 = vset.pattern.permute.xlu0 0
    %56 = vperm.xlu0 %55, %v38
    %v57 = vpop.permute.xlu0 %56
    %60 = vset.pattern.permute.xlu0 0
    %61 = vperm.xlu0 %60, %v39
    %v62 = vpop.permute.xlu0 %61
    %65 = vset.pattern.permute.xlu0 0
    %66 = vperm.xlu0 %65, %v40
    %v67 = vpop.permute.xlu0 %66
    %70 = vset.pattern.permute.xlu0 0
    %71 = vperm.xlu0 %70, %v41
    %v72 = vpop.permute.xlu0 %71
    %75 = vset.pattern.permute.xlu0 0
    %76 = vperm.xlu0 %75, %v42
    %v77 = vpop.permute.xlu0 %76
    %80 = vset.pattern.permute.xlu0 0
    %81 = vperm.xlu0 %80, %v43
    %v82 = vpop.permute.xlu0 %81
    %85 = vset.pattern.permute.xlu0 0
    %86 = vperm.xlu0 %85, %v44
    %v87 = vpop.permute.xlu0 %86
    %90 = vset.pattern.permute.xlu0 0
    %91 = vperm.xlu0 %90, %v45
    %v92 = vpop.permute.xlu0 %91
    %95 = vset.pattern.permute.xlu0 0
    %96 = vperm.xlu0 %95, %v46
    %v97 = vpop.permute.xlu0 %96
    %100 = vset.pattern.permute.xlu0 0
    %101 = vperm.xlu0 %100, %v47
    %v102 = vpop.permute.xlu0 %101
    %105 = vset.pattern.permute.xlu0 0
    %106 = vperm.xlu0 %105, %v48
    %v107 = vpop.permute.xlu0 %106
    %110 = vset.pattern.permute.xlu0 0
    %111 = vperm.xlu0 %110, %v49
    %v112 = vpop.permute.xlu0 %111
    %115 = vset.pattern.permute.xlu0 0
    %116 = vperm.xlu0 %115, %v50
    %v117 = vpop.permute.xlu0 %116
    %120 = vset.pattern.permute.xlu0 0
    %121 = vperm.xlu0 %120, %v51
    %v122 = vpop.permute.xlu0 %121
    %125 = vset.pattern.permute.xlu0 0
    %126 = vperm.xlu0 %125, %v52
    %v127 = vpop.permute.xlu0 %126
    %130 = vset.pattern.permute.xlu0 0
    %131 = vperm.xlu0 %130, %v53
    %v132 = vpop.permute.xlu0 %131
    %vm134 = vcmask 64512
    %v136 = vsel %vm134, %v22, 0
    %v139 = vsel %vm134, %v23, 0
    %v142 = vsel %vm134, %v24, 0
    %v145 = vsel %vm134, %v25, 0
    %v148 = vsel %vm134, %v26, 0
    %v151 = vsel %vm134, %v27, 0
    %v154 = vsel %vm134, %v28, 0
    %v157 = vsel %vm134, %v29, 0
    %v160 = vsel %vm134, %v30, 0
    %v163 = vsel %vm134, %v31, 0
    %v166 = vsel %vm134, %v32, 0
    %v169 = vsel %vm134, %v33, 0
    %v172 = vsel %vm134, %v34, 0
    %v175 = vsel %vm134, %v35, 0
    %v178 = vsel %vm134, %v36, 0
    %v181 = vsel %vm134, %v37, 0
    %183 = vmatprep.subr.mxu0 0.0
    %184 = vmatpush1.msra.mxu0 %v21
    %185 = vmatprep.subr.mxu0 0.0
    %186 = vmatpush1.msra.mxu0 0.0
    %187 = vmatprep.subr.mxu0 0.0
    %188 = vmatpush1.msra.mxu0 0.0
    %189 = vmatprep.subr.mxu0 0.0
    %190 = vmatpush1.msra.mxu0 0.0
    %191 = vmatprep.subr.mxu0 0.0
    %192 = vmatpush1.msra.mxu0 0.0
    %193 = vmatprep.subr.mxu0 0.0
    %194 = vmatpush1.msra.mxu0 0.0
    %195 = vmatprep.subr.mxu0 0.0
    %196 = vmatpush1.msra.mxu0 0.0
    %197 = vmatprep.subr.mxu0 0.0
    %198 = vmatpush1.msra.mxu0 0.0
    %199 = vmatprep.subr.mxu0 0.0
    %200 = vmatpush1.msra.mxu0 0.0
    %201 = vmatprep.subr.mxu0 0.0
    %202 = vmatpush1.msra.mxu0 0.0
    %203 = vmatprep.subr.mxu0 0.0
    %204 = vmatpush1.msra.mxu0 0.0
    %205 = vmatprep.subr.mxu0 0.0
    %206 = vmatpush1.msra.mxu0 0.0
    %207 = vmatprep.subr.mxu0 0.0
    %208 = vmatpush1.msra.mxu0 0.0
    %209 = vmatprep.subr.mxu0 0.0
    %210 = vmatpush1.msra.mxu0 0.0
    %211 = vmatprep.subr.mxu0 0.0
    %212 = vmatpush1.msra.mxu0 0.0
    %213 = vmatprep.subr.mxu0 0.0
    %214 = vmatpush1.msra.mxu0 0.0
    %215 = vmatprep.subr.mxu0 0.0
    %216 = vmatpush1.msra.mxu0 0.0
    %217 = vmatprep.subr.mxu0 0.0
    %218 = vmatpush1.msra.mxu0 0.0
    %219 = vmatprep.subr.mxu0 0.0
    %220 = vmatpush1.msra.mxu0 0.0
    %221 = vmatprep.subr.mxu0 0.0
    %222 = vmatpush1.msra.mxu0 0.0
    %223 = vmatprep.subr.mxu0 0.0
    %224 = vmatpush1.msra.mxu0 0.0
    %225 = vmatprep.subr.mxu0 0.0
    %226 = vmatpush1.msra.mxu0 0.0
    %227 = vmatprep.subr.mxu0 0.0
    %228 = vmatpush1.msra.mxu0 0.0
    %229 = vmatprep.subr.mxu0 0.0
    %230 = vmatpush1.msra.mxu0 0.0
    %231 = vmatprep.subr.mxu0 0.0
    %232 = vmatpush1.msra.mxu0 0.0
    %233 = vmatprep.subr.mxu0 0.0
    %234 = vmatpush1.msra.mxu0 0.0
    %235 = vmatprep.subr.mxu0 0.0
    %236 = vmatpush1.msra.mxu0 0.0
    %237 = vmatprep.subr.mxu0 0.0
    %238 = vmatpush1.msra.mxu0 0.0
    %239 = vmatprep.subr.mxu0 0.0
    %240 = vmatpush1.msra.mxu0 0.0
    %241 = vmatprep.subr.mxu0 0.0
    %242 = vmatpush1.msra.mxu0 0.0
    %243 = vmatprep.subr.mxu0 0.0
    %244 = vmatpush1.msra.mxu0 0.0
    %245 = vmatprep.subr.mxu0 0.0
    %246 = vmatpush1.msra.mxu0 0.0
    %247 = vmatprep.mubr.f32.mxu0 0.0
    %248 = vmatmul.mubr.f32.gmra.mrb[0].mxu0 %v136
    %v249 = vpop.f32.mrb[0].mxu0
    %v250 = vadd.f32 %v57, %v249
    %v251 = vpop.f32.mrb[0].mxu0
    %252 = vmatprep.mubr.f32.mxu0 0.0
    %253 = vmatmul.mubr.f32.gmra.mrb[0].mxu0 %v139
    %v254 = vpop.f32.mrb[0].mxu0
    %v255 = vadd.f32 %v62, %v254
    %v256 = vpop.f32.mrb[0].mxu0
    %257 = vmatprep.mubr.f32.mxu0 0.0
    %258 = vmatmul.mubr.f32.gmra.mrb[0].mxu0 %v142
    %v259 = vpop.f32.mrb[0].mxu0
    %v260 = vadd.f32 %v67, %v259
    %v261 = vpop.f32.mrb[0].mxu0
    %262 = vmatprep.mubr.f32.mxu0 0.0
    %263 = vmatmul.mubr.f32.gmra.mrb[0].mxu0 %v145
    %v264 = vpop.f32.mrb[0].mxu0
    %v265 = vadd.f32 %v72, %v264
    %v266 = vpop.f32.mrb[0].mxu0
    %267 = vmatprep.mubr.f32.mxu0 0.0
    %268 = vmatmul.mubr.f32.gmra.mrb[0].mxu0 %v148
    %v269 = vpop.f32.mrb[0].mxu0
    %v270 = vadd.f32 %v77, %v269
    %v271 = vpop.f32.mrb[0].mxu0
    %272 = vmatprep.mubr.f32.mxu0 0.0
    %273 = vmatmul.mubr.f32.gmra.mrb[0].mxu0 %v151
    %v274 = vpop.f32.mrb[0].mxu0
    %v275 = vadd.f32 %v82, %v274
    %v276 = vpop.f32.mrb[0].mxu0
    %277 = vmatprep.mubr.f32.mxu0 0.0
    %278 = vmatmul.mubr.f32.gmra.mrb[0].mxu0 %v154
    %v279 = vpop.f32.mrb[0].mxu0
    %v280 = vadd.f32 %v87, %v279
    %v281 = vpop.f32.mrb[0].mxu0
    %282 = vmatprep.mubr.f32.mxu0 0.0
    %283 = vmatmul.mubr.f32.gmra.mrb[0].mxu0 %v157
    %v284 = vpop.f32.mrb[0].mxu0
    %v285 = vadd.f32 %v92, %v284
    %v286 = vpop.f32.mrb[0].mxu0
    %287 = vmatprep.mubr.f32.mxu0 0.0
    %288 = vmatmul.mubr.f32.gmra.mrb[0].mxu0 %v160
    %v289 = vpop.f32.mrb[0].mxu0
    %v290 = vadd.f32 %v97, %v289
    %v291 = vpop.f32.mrb[0].mxu0
    %292 = vmatprep.mubr.f32.mxu0 0.0
    %293 = vmatmul.mubr.f32.gmra.mrb[0].mxu0 %v163
    %v294 = vpop.f32.mrb[0].mxu0
    %v295 = vadd.f32 %v102, %v294
    %v296 = vpop.f32.mrb[0].mxu0
    %297 = vmatprep.mubr.f32.mxu0 0.0
    %298 = vmatmul.mubr.f32.gmra.mrb[0].mxu0 %v166
    %v299 = vpop.f32.mrb[0].mxu0
    %v300 = vadd.f32 %v107, %v299
    %v301 = vpop.f32.mrb[0].mxu0
    %302 = vmatprep.mubr.f32.mxu0 0.0
    %303 = vmatmul.mubr.f32.gmra.mrb[0].mxu0 %v169
    %v304 = vpop.f32.mrb[0].mxu0
    %v305 = vadd.f32 %v112, %v304
    %v306 = vpop.f32.mrb[0].mxu0
    %307 = vmatprep.mubr.f32.mxu0 0.0
    %308 = vmatmul.mubr.f32.gmra.mrb[0].mxu0 %v172
    %v309 = vpop.f32.mrb[0].mxu0
    %v310 = vadd.f32 %v117, %v309
    %v311 = vpop.f32.mrb[0].mxu0
    %312 = vmatprep.mubr.f32.mxu0 0.0
    %313 = vmatmul.mubr.f32.gmra.mrb[0].mxu0 %v175
    %v314 = vpop.f32.mrb[0].mxu0
    %v315 = vadd.f32 %v122, %v314
    %v316 = vpop.f32.mrb[0].mxu0
    %317 = vmatprep.mubr.f32.mxu0 0.0
    %318 = vmatmul.mubr.f32.gmra.mrb[0].mxu0 %v178
    %v319 = vpop.f32.mrb[0].mxu0
    %v320 = vadd.f32 %v127, %v319
    %v321 = vpop.f32.mrb[0].mxu0
    %322 = vmatprep.mubr.f32.mxu0 0.0
    %323 = vmatmul.mubr.f32.gmra.mrb[0].mxu0 %v181
    %v324 = vpop.f32.mrb[0].mxu0
    %v325 = vadd.f32 %v132, %v324
    %v326 = vpop.f32.mrb[0].mxu0
    %327 = vdwg.mxu0
    %v328 = vmax.f32 %v250, 0.0
    %v329 = vmax.f32 %v255, 0.0
    %v330 = vmax.f32 %v260, 0.0
    %v331 = vmax.f32 %v265, 0.0
    %v332 = vmax.f32 %v270, 0.0
    %v333 = vmax.f32 %v275, 0.0
    %v334 = vmax.f32 %v280, 0.0
    %v335 = vmax.f32 %v285, 0.0
    %v336 = vmax.f32 %v290, 0.0
    %v337 = vmax.f32 %v295, 0.0
    %v338 = vmax.f32 %v300, 0.0
    %v339 = vmax.f32 %v305, 0.0
    %v340 = vmax.f32 %v310, 0.0
    %v341 = vmax.f32 %v315, 0.0
    %v342 = vmax.f32 %v320, 0.0
    %v343 = vmax.f32 %v325, 0.0
    %v344 = vld [vmem:[%s3] sm:$0xff]
    %v345 = vld [vmem:[%s4] sm:$0xff]
    %347 = vset.pattern.permute.xlu0 0
    %348 = vperm.xlu0 %347, %v345
    %v349 = vpop.permute.xlu0 %348
    %351 = vmatprep.subr.mxu0 0.0
    %352 = vmatpush1.msra.mxu0 %v328
    %353 = vmatprep.subr.mxu0 0.0
    %354 = vmatpush1.msra.mxu0 %v329
    %355 = vmatprep.subr.mxu0 0.0
    %356 = vmatpush1.msra.mxu0 %v330
    %357 = vmatprep.subr.mxu0 0.0
    %358 = vmatpush1.msra.mxu0 %v331
    %359 = vmatprep.subr.mxu0 0.0
    %360 = vmatpush1.msra.mxu0 %v332
    %361 = vmatprep.subr.mxu0 0.0
    %362 = vmatpush1.msra.mxu0 %v333
    %363 = vmatprep.subr.mxu0 0.0
    %364 = vmatpush1.msra.mxu0 %v334
    %365 = vmatprep.subr.mxu0 0.0
    %366 = vmatpush1.msra.mxu0 %v335
    %367 = vmatprep.subr.mxu0 0.0
    %368 = vmatpush1.msra.mxu0 %v336
    %369 = vmatprep.subr.mxu0 0.0
    %370 = vmatpush1.msra.mxu0 %v337
    %371 = vmatprep.subr.mxu0 0.0
    %372 = vmatpush1.msra.mxu0 %v338
    %373 = vmatprep.subr.mxu0 0.0
    %374 = vmatpush1.msra.mxu0 %v339
    %375 = vmatprep.subr.mxu0 0.0
    %376 = vmatpush1.msra.mxu0 %v340
    %377 = vmatprep.subr.mxu0 0.0
    %378 = vmatpush1.msra.mxu0 %v341
    %379 = vmatprep.subr.mxu0 0.0
    %380 = vmatpush1.msra.mxu0 %v342
    %381 = vmatprep.subr.mxu0 0.0
    %382 = vmatpush1.msra.mxu0 %v343
    %383 = vmatprep.subr.mxu0 0.0
    %384 = vmatpush1.msra.mxu0 0.0
    %385 = vmatprep.subr.mxu0 0.0
    %386 = vmatpush1.msra.mxu0 0.0
    %387 = vmatprep.subr.mxu0 0.0
    %388 = vmatpush1.msra.mxu0 0.0
    %389 = vmatprep.subr.mxu0 0.0
    %390 = vmatpush1.msra.mxu0 0.0
    %391 = vmatprep.subr.mxu0 0.0
    %392 = vmatpush1.msra.mxu0 0.0
    %393 = vmatprep.subr.mxu0 0.0
    %394 = vmatpush1.msra.mxu0 0.0
    %395 = vmatprep.subr.mxu0 0.0
    %396 = vmatpush1.msra.mxu0 0.0
    %397 = vmatprep.subr.mxu0 0.0
    %398 = vmatpush1.msra.mxu0 0.0
    %399 = vmatprep.subr.mxu0 0.0
    %400 = vmatpush1.msra.mxu0 0.0
    %401 = vmatprep.subr.mxu0 0.0
    %402 = vmatpush1.msra.mxu0 0.0
    %403 = vmatprep.subr.mxu0 0.0
    %404 = vmatpush1.msra.mxu0 0.0
    %405 = vmatprep.subr.mxu0 0.0
    %406 = vmatpush1.msra.mxu0 0.0
    %407 = vmatprep.subr.mxu0 0.0
    %408 = vmatpush1.msra.mxu0 0.0
    %409 = vmatprep.subr.mxu0 0.0
    %410 = vmatpush1.msra.mxu0 0.0
    %411 = vmatprep.subr.mxu0 0.0
    %412 = vmatpush1.msra.mxu0 0.0
    %413 = vmatprep.subr.mxu0 0.0
    %414 = vmatpush1.msra.mxu0 0.0
    %415 = vmatprep.mubr.f32.mxu0 0.0
    %416 = vmatmul.mubr.f32.gmra.mrb[0].mxu0 %v344
    %v417 = vpop.f32.mrb[0].mxu0
    %v418 = vadd.f32 %v349, %v417
    %v419 = vpop.f32.mrb[0].mxu0
    %420 = vdwg.mxu0
    %421 = vst [vmem:[#allocation2] sm:$0xff] %v418
    // Predicated region
    $region22: #{tpu_custom_call.1} parent=1 // pred_check
      _
    $region23: #{tpu_custom_call.1} parent=1 // pred_check_branch
      %423 = sbr.rel (0) target = $region25
    $region24: #{tpu_custom_call.1} parent=1 // pred_region
      %s425 = ssub.s32 128, 128
      %426 = vsyncadd [#allocation3], %s425
      %s428 = sshll.u32 [#allocation2], 4
      %s429 = int_to_ptr.vmem [resolvable:$true] %s428
      %431 = dma.vmem_to_hbm [thread:$0]  %s429, 128, %s5, [#allocation3]
    $region25: #{tpu_custom_call.1} parent=1 // pred_fallthru
      _
    // Predicated region
    $region26: #{tpu_custom_call.1} parent=1 // pred_check
      _
    $region27: #{tpu_custom_call.1} parent=1 // pred_check_branch
      %433 = sbr.rel (0) target = $region29
    $region28: #{tpu_custom_call.1} parent=1 // pred_region
      %434 = dma.done [#allocation3], 128
    $region29: #{tpu_custom_call.1} parent=1 // pred_fallthru
      _
    %435 = vsyncpa [#allocation3], 1

</llo_original>
